<compile_context>
chip_gen: v6e
topology: v6e:2x2x1
jax: 0.10.0
libtpu: 0.0.40
codegen_flags: <defaults>
</compile_context>

<pallas_src>
import jax
import jax.numpy as jnp
from jax.experimental import pallas as pl
from jax.experimental.pallas import tpu as pltpu

_MIB = 1024 * 1024


def _cdiv(a, b):
    return -(-a // b)


def _physical_vmem_bytes():
    """Per-TensorCore VMEM of the current chip (conservative on failure)."""
    kind = ""
    try:
        kind = jax.devices()[0].device_kind.lower()
    except Exception:
        pass
    is_v7 = ("v7" in kind) or ("7x" in kind)
    vmem = None
    try:
        vmem = int(pltpu.get_tpu_info().vmem_capacity_bytes)
    except Exception:
        vmem = None
    if vmem is None:
        vmem = 64 * _MIB if is_v7 else 128 * _MIB
    if is_v7:
        vmem = min(vmem, 64 * _MIB)  # v7x VMEM is 64 MiB per TensorCore
    return vmem


def oregion_module(pixel_representations, soft_object_regions, *, max_hw_tile=None):
    """Object-region aggregation.

    pixel_representations: [B, C, H, W]  (bf16 or f32 -- the op is HBM-bound
        and pix is the dominant stream, so keep it bf16 from the producer).
    soft_object_regions:   [B, K, H, W]  (logits; softmax over H*W is fused).
    Returns: [B, C, K, 1].
    """
    B, C, H, W = pixel_representations.shape
    Bs, K, Hs, Ws = soft_object_regions.shape
    assert (B, H, W) == (Bs, Hs, Ws), "batch / spatial dims must match"
    HW = H * W
    out_dtype = pixel_representations.dtype

    pix_isz = jnp.dtype(pixel_representations.dtype).itemsize
    soft_isz = jnp.dtype(soft_object_regions.dtype).itemsize
    out_isz = jnp.dtype(out_dtype).itemsize

    pix = pixel_representations.reshape(B, C, HW)
    soft = soft_object_regions.reshape(B, K, HW)

    # ---- C tiling (parallel axis) -------------------------------------------
    c_tile = C
    if C > 512 and C % 512 == 0:
        c_tile = 512
    n_c = C // c_tile
    # v7x has two TensorCores: ensure the parallel grid (B * n_c) >= 2.
    if B * n_c < 2 and (c_tile % 256 == 0):
        c_tile //= 2
        n_c = C // c_tile

    # ---- HW tiling (reduction axis), sized from physical VMEM ---------------
    usable_vmem = min(_physical_vmem_bytes() - 8 * _MIB, 100 * _MIB)
    fixed_bytes = (3 * c_tile * K * 4          # acc scratch + result temp
                   + 2 * c_tile * K * out_isz  # out double-buffer
                   + 256 * 1024)               # m/l scratch, misc slack
    per_hw_bytes = (2 * c_tile * pix_isz       # pix double-buffer
                    + c_tile * pix_isz         # masked pix copy (ragged path)
                    + 2 * K * soft_isz         # soft double-buffer
                    + 5 * K * 4                # s / e f32 temporaries
                    + 2 * K * pix_isz)         # e cast + MXU relayout of e
    budget = max(128, (usable_vmem - fixed_bytes) // per_hw_bytes)
    if max_hw_tile is not None:
        budget = min(budget, max_hw_tile)

    if HW <= budget:
        hw_tile, n_hw, ragged = HW, 1, False   # single full block, no masking
    else:
        budget = max(128, (budget // 128) * 128)
        n_hw = _cdiv(HW, budget)
        hw_tile = (_cdiv(HW, n_hw) + 127) // 128 * 128   # minimal, lane-aligned
        ragged = (HW % hw_tile) != 0

    approx_recip = jnp.dtype(out_dtype) != jnp.float32

    # ---- kernel --------------------------------------------------------------
    def kernel(pix_ref, soft_ref, out_ref, m_ref, l_ref, acc_ref):
        hw_idx = pl.program_id(2)

        @pl.when(hw_idx == 0)
        def _init():
            m_ref[...] = jnp.full(m_ref.shape, -jnp.inf, dtype=jnp.float32)
            l_ref[...] = jnp.zeros(l_ref.shape, dtype=jnp.float32)
            acc_ref[...] = jnp.zeros(acc_ref.shape, dtype=jnp.float32)

        s = soft_ref[0].astype(jnp.float32)       # [K, T]
        pix_t = pix_ref[0]                        # [C_TILE, T], native dtype

        if ragged:
            # Mask the out-of-range tail of the last (partial) HW block.
            lane = jax.lax.broadcasted_iota(jnp.int32, (1, hw_tile), 1)
            valid = (hw_idx * hw_tile + lane) < HW            # [1, T]
            s = jnp.where(valid, s, -jnp.inf)                 # => e == 0 there
            pix_t = jnp.where(valid, pix_t, 0.0)              # no NaN into MXU

        m_old = m_ref[...]                                           # [K, 1]
        m_new = jnp.maximum(m_old, jnp.max(s, axis=-1, keepdims=True))
        alpha = jnp.exp(m_old - m_new)                               # [K, 1]
        e = jnp.exp(s - m_new)                                       # [K, T] f32

        l_ref[...] = alpha * l_ref[...] + jnp.sum(e, axis=-1, keepdims=True)
        # acc[c, k] = alpha[k] * acc[c, k] + sum_t pix[c, t] * e[k, t]
        # pix (large) is the canonical, non-transposed MXU operand; only the
        # small e tile is relaid out.  e -> pix.dtype keeps the MXU in bf16 on
        # the bf16 path (accumulation stays f32 via preferred_element_type).
        acc_ref[...] = (jnp.transpose(alpha) * acc_ref[...]
                        + jax.lax.dot_general(
                            pix_t, e.astype(pix_t.dtype),
                            dimension_numbers=(((1,), (1,)), ((), ())),
                            preferred_element_type=jnp.float32))
        m_ref[...] = m_new

        @pl.when(hw_idx == pl.num_programs(2) - 1)
        def _finalize():
            # Exact reciprocal on the f32 output path (runs once per tile);
            # EUP approx only when the output is bf16 anyway.
            inv_l = pl.reciprocal(l_ref[...], approx=approx_recip)   # [K, 1]
            out_ref[0] = (acc_ref[...] * jnp.transpose(inv_l)).astype(out_ref.dtype)

    # ---- pallas_call ----------------------------------------------------------
    vmem_needed = fixed_bytes + per_hw_bytes * hw_tile
    vmem_limit = int(min(usable_vmem, max(vmem_needed + 8 * _MIB, 32 * _MIB)))
    vmem_limit = int(max(vmem_limit, vmem_needed + 2 * _MIB))

    hw_cov = n_hw * hw_tile
    cost = pl.CostEstimate(
        flops=2 * B * n_c * c_tile * K * hw_cov,
        transcendentals=B * n_c * K * hw_cov,
        bytes_accessed=(B * C * HW * pix_isz
                        + B * n_c * K * HW * soft_isz
                        + B * C * K * out_isz),
    )

    out = pl.pallas_call(
        kernel,
        out_shape=jax.ShapeDtypeStruct((B, C, K), out_dtype),
        grid=(B, n_c, n_hw),
        in_specs=[
            pl.BlockSpec((1, c_tile, hw_tile), lambda b, c, h: (b, c, h)),
            pl.BlockSpec((1, K, hw_tile), lambda b, c, h: (b, 0, h)),
        ],
        out_specs=pl.BlockSpec((1, c_tile, K), lambda b, c, h: (b, c, 0)),
        scratch_shapes=[
            pltpu.VMEM((K, 1), jnp.float32),        # running max
            pltpu.VMEM((K, 1), jnp.float32),        # running sum
            pltpu.VMEM((c_tile, K), jnp.float32),   # un-normalized accumulator
        ],
        compiler_params=pltpu.CompilerParams(
            dimension_semantics=("parallel", "parallel", "arbitrary"),
            vmem_limit_bytes=vmem_limit,
        ),
        cost_estimate=cost,
    )(pix, soft)

    # [B, C, K] is already channel-major (matches permute(0,2,1)); just add the
    # trailing singleton dim (unsqueeze(3)).
    return out[..., None]


def _reference(pixel_representations, soft_object_regions):
    B, C, H, W = pixel_representations.shape
    _, K, _, _ = soft_object_regions.shape
    pix = pixel_representations.reshape(B, C, H * W).astype(jnp.float32)
    soft = jax.nn.softmax(
        soft_object_regions.reshape(B, K, H * W).astype(jnp.float32), axis=2)
    out = jnp.einsum("bkl,bcl->bck", soft, pix)          # [B, C, K]
    return out[..., None]                                # [B, C, K, 1]


if __name__ == "__main__":
    key = jax.random.PRNGKey(0)
    k1, k2, k3, k4 = jax.random.split(key, 4)

    # Case 1: canonical small shapes (single HW block, no masking).
    B, C, K, H, W = 2, 32, 8, 16, 16
    pix = jax.random.normal(k1, (B, C, H, W), dtype=jnp.float32)
    soft = jax.random.normal(k2, (B, K, H, W), dtype=jnp.float32)
    ref = _reference(pix, soft)

    out = jax.block_until_ready(oregion_module(pix, soft))
    assert out.shape == (B, C, K, 1), out.shape
    assert jnp.allclose(out, ref, atol=2e-3, rtol=2e-3), float(
        jnp.max(jnp.abs(out - ref)))

    # Case 2: ragged HW (H*W = 288 streamed in 128-wide blocks) -> exercises the
    # in-kernel lane mask + multi-block online softmax (no wrapper padding).
    B2, C2, K2, H2, W2 = 2, 16, 8, 16, 18
    pix2 = jax.random.normal(k3, (B2, C2, H2, W2), dtype=jnp.float32)
    soft2 = jax.random.normal(k4, (B2, K2, H2, W2), dtype=jnp.float32)
    ref2 = _reference(pix2, soft2)
    out2 = jax.block_until_ready(oregion_module(pix2, soft2, max_hw_tile=128))
    assert out2.shape == (B2, C2, K2, 1), out2.shape
    assert jnp.allclose(out2, ref2, atol=2e-3, rtol=2e-3), float(
        jnp.max(jnp.abs(out2 - ref2)))

    # Case 3: bf16 pixel features (dominant HBM stream stays bf16; looser tol
    # since the softmax weights are also rounded to bf16 for the MXU).
    out_bf = jax.block_until_ready(
        oregion_module(pix.astype(jnp.bfloat16), soft))
    assert out_bf.shape == (B, C, K, 1), out_bf.shape
    assert jnp.allclose(out_bf.astype(jnp.float32), ref, atol=5e-2, rtol=5e-2)

    print("KERNEL_OK")
</pallas_src>

<mosaic_0001>
module attributes {stable_mosaic.version = 11 : i64} {
  func.func @kernel(%arg0: i32, %arg1: i32, %arg2: i32, %arg3: memref<1x32x256xf32, #tpu.memory_space<vmem>>, %arg4: memref<1x8x256xf32, #tpu.memory_space<vmem>>, %arg5: memref<1x32x8xf32, #tpu.memory_space<vmem>>, %arg6: memref<8x1xf32, #tpu.memory_space<vmem>>, %arg7: memref<8x1xf32, #tpu.memory_space<vmem>>, %arg8: memref<32x8xf32, #tpu.memory_space<vmem>>) attributes {dimension_semantics = [#tpu.dimension_semantics<parallel>, #tpu.dimension_semantics<parallel>, #tpu.dimension_semantics<arbitrary>], iteration_bounds = array<i64: 2, 1, 1>, scalar_prefetch = 0 : i64, scratch_operands = 3 : i64, tpu.core_type = #tpu.core_type<tc>, window_params = [{transform_indices = @transform_0, window_bounds = array<i64: 1, 32, 256>}, {transform_indices = @transform_1, window_bounds = array<i64: 1, 8, 256>}, {transform_indices = @transform_2, window_bounds = array<i64: 1, 32, 8>}]} {
    %c0_i32 = arith.constant 0 : i32
    %0 = arith.cmpi eq, %arg2, %c0_i32 : i32
    %1 = arith.extui %0 : i1 to i32
    %c0_i32_0 = arith.constant 0 : i32
    %2 = arith.cmpi ne, %1, %c0_i32_0 : i32
    scf.if %2 {
      %cst_22 = arith.constant 0xFF800000 : f32
      %33 = vector.broadcast %cst_22 : f32 to vector<8x1xf32>
      %c0_23 = arith.constant 0 : index
      %c0_24 = arith.constant 0 : index
      %34 = vector.load %arg6[%c0_23, %c0_24] : memref<8x1xf32, #tpu.memory_space<vmem>>, vector<8x1xf32>
      tpu.vector_store %arg6[%c0_23, %c0_24], %33 {strides = array<i32>} : memref<8x1xf32, #tpu.memory_space<vmem>>, vector<8x1xf32>,
      %cst_25 = arith.constant 0.000000e+00 : f32
      %35 = vector.broadcast %cst_25 : f32 to vector<8x1xf32>
      %c0_26 = arith.constant 0 : index
      %c0_27 = arith.constant 0 : index
      %36 = vector.load %arg7[%c0_26, %c0_27] : memref<8x1xf32, #tpu.memory_space<vmem>>, vector<8x1xf32>
      tpu.vector_store %arg7[%c0_26, %c0_27], %35 {strides = array<i32>} : memref<8x1xf32, #tpu.memory_space<vmem>>, vector<8x1xf32>,
      %cst_28 = arith.constant 0.000000e+00 : f32
      %37 = vector.broadcast %cst_28 : f32 to vector<32x8xf32>
      %c0_29 = arith.constant 0 : index
      %c0_30 = arith.constant 0 : index
      %38 = vector.load %arg8[%c0_29, %c0_30] : memref<32x8xf32, #tpu.memory_space<vmem>>, vector<32x8xf32>
      tpu.vector_store %arg8[%c0_29, %c0_30], %37 {strides = array<i32>} : memref<32x8xf32, #tpu.memory_space<vmem>>, vector<32x8xf32>,
    } else {
    }
    %c0 = arith.constant 0 : index
    %c0_1 = arith.constant 0 : index
    %c0_2 = arith.constant 0 : index
    %3 = vector.load %arg4[%c0, %c0_1, %c0_2] : memref<1x8x256xf32, #tpu.memory_space<vmem>>, vector<1x8x256xf32>
    %4 = vector.shape_cast %3 : vector<1x8x256xf32> to vector<8x256xf32>
    %c0_3 = arith.constant 0 : index
    %c0_4 = arith.constant 0 : index
    %c0_5 = arith.constant 0 : index
    %5 = vector.load %arg3[%c0_3, %c0_4, %c0_5] : memref<1x32x256xf32, #tpu.memory_space<vmem>>, vector<1x32x256xf32>
    %6 = vector.shape_cast %5 : vector<1x32x256xf32> to vector<32x256xf32>
    %c0_6 = arith.constant 0 : index
    %c0_7 = arith.constant 0 : index
    %7 = vector.load %arg6[%c0_6, %c0_7] : memref<8x1xf32, #tpu.memory_space<vmem>>, vector<8x1xf32>
    %cst = arith.constant dense<0xFF800000> : vector<8xf32>
    %8 = vector.multi_reduction <maximumf>, %4, %cst [1] : vector<8x256xf32> to vector<8xf32>
    %9 = vector.shape_cast %8 : vector<8xf32> to vector<8x1xf32>
    %10 = arith.maximumf %7, %9 : vector<8x1xf32>
    %11 = arith.subf %7, %10 : vector<8x1xf32>
    %12 = math.exp %11 : vector<8x1xf32>
    %13 = vector.broadcast %10 : vector<8x1xf32> to vector<8x256xf32>
    %14 = arith.subf %4, %13 : vector<8x256xf32>
    %15 = math.exp %14 : vector<8x256xf32>
    %c0_8 = arith.constant 0 : index
    %c0_9 = arith.constant 0 : index
    %16 = vector.load %arg7[%c0_8, %c0_9] : memref<8x1xf32, #tpu.memory_space<vmem>>, vector<8x1xf32>
    %17 = arith.mulf %12, %16 : vector<8x1xf32>
    %cst_10 = arith.constant dense<0.000000e+00> : vector<8xf32>
    %18 = vector.multi_reduction <add>, %15, %cst_10 [1] : vector<8x256xf32> to vector<8xf32>
    %19 = vector.shape_cast %18 : vector<8xf32> to vector<8x1xf32>
    %20 = arith.addf %17, %19 : vector<8x1xf32>
    %c0_11 = arith.constant 0 : index
    %c0_12 = arith.constant 0 : index
    %21 = vector.load %arg7[%c0_11, %c0_12] : memref<8x1xf32, #tpu.memory_space<vmem>>, vector<8x1xf32>
    tpu.vector_store %arg7[%c0_11, %c0_12], %20 {strides = array<i32>} : memref<8x1xf32, #tpu.memory_space<vmem>>, vector<8x1xf32>,
    %22 = tpu.transpose %12, [1, 0] : vector<8x1xf32> -> vector<1x8xf32>
    %c0_13 = arith.constant 0 : index
    %c0_14 = arith.constant 0 : index
    %23 = vector.load %arg8[%c0_13, %c0_14] : memref<32x8xf32, #tpu.memory_space<vmem>>, vector<32x8xf32>
    %24 = vector.broadcast %22 : vector<1x8xf32> to vector<32x8xf32>
    %25 = arith.mulf %24, %23 : vector<32x8xf32>
    %cst_15 = arith.constant dense<0.000000e+00> : vector<32x8xf32>
    %26 = tpu.matmul %6, %15, %cst_15 {dimension_numbers = #tpu.dot_dimension_numbers<[1], [1], [0], [0], [0, 0, 1, 0], [], []>} : vector<32x256xf32>, vector<8x256xf32>, vector<32x8xf32> -> vector<32x8xf32>
    %27 = arith.addf %25, %26 : vector<32x8xf32>
    %c0_16 = arith.constant 0 : index
    %c0_17 = arith.constant 0 : index
    %28 = vector.load %arg8[%c0_16, %c0_17] : memref<32x8xf32, #tpu.memory_space<vmem>>, vector<32x8xf32>
    tpu.vector_store %arg8[%c0_16, %c0_17], %27 {strides = array<i32>} : memref<32x8xf32, #tpu.memory_space<vmem>>, vector<32x8xf32>,
    %c0_18 = arith.constant 0 : index
    %c0_19 = arith.constant 0 : index
    %29 = vector.load %arg6[%c0_18, %c0_19] : memref<8x1xf32, #tpu.memory_space<vmem>>, vector<8x1xf32>
    tpu.vector_store %arg6[%c0_18, %c0_19], %10 {strides = array<i32>} : memref<8x1xf32, #tpu.memory_space<vmem>>, vector<8x1xf32>,
    %c0_i32_20 = arith.constant 0 : i32
    %30 = arith.cmpi eq, %arg2, %c0_i32_20 : i32
    %31 = arith.extui %30 : i1 to i32
    %c0_i32_21 = arith.constant 0 : i32
    %32 = arith.cmpi ne, %31, %c0_i32_21 : i32
    scf.if %32 {
      %c0_22 = arith.constant 0 : index
      %c0_23 = arith.constant 0 : index
      %33 = vector.load %arg7[%c0_22, %c0_23] : memref<8x1xf32, #tpu.memory_space<vmem>>, vector<8x1xf32>
      %34 = tpu.reciprocal %33 : vector<8x1xf32> -> vector<8x1xf32>
      %c0_24 = arith.constant 0 : index
      %c0_25 = arith.constant 0 : index
      %35 = vector.load %arg8[%c0_24, %c0_25] : memref<32x8xf32, #tpu.memory_space<vmem>>, vector<32x8xf32>
      %36 = tpu.transpose %34, [1, 0] : vector<8x1xf32> -> vector<1x8xf32>
      %37 = vector.broadcast %36 : vector<1x8xf32> to vector<32x8xf32>
      %38 = arith.mulf %35, %37 : vector<32x8xf32>
      %c0_26 = arith.constant 0 : index
      %c0_27 = arith.constant 0 : index
      %c0_28 = arith.constant 0 : index
      %39 = vector.load %arg5[%c0_26, %c0_27, %c0_28] : memref<1x32x8xf32, #tpu.memory_space<vmem>>, vector<1x32x8xf32>
      %40 = vector.shape_cast %39 : vector<1x32x8xf32> to vector<32x8xf32>
      %41 = vector.shape_cast %38 : vector<32x8xf32> to vector<1x32x8xf32>
      tpu.vector_store %arg5[%c0_26, %c0_27, %c0_28], %41 {strides = array<i32>} : memref<1x32x8xf32, #tpu.memory_space<vmem>>, vector<1x32x8xf32>,
    } else {
    }
    return
  }
  func.func @transform_0(%arg0: i32, %arg1: i32, %arg2: i32) -> (i32, i32, i32) {
    %c0_i32 = arith.constant 0 : i32
    return %arg0, %arg1, %arg2 : i32, i32, i32
  }
  func.func @transform_1(%arg0: i32, %arg1: i32, %arg2: i32) -> (i32, i32, i32) {
    %c0_i32 = arith.constant 0 : i32
    %c0_i32_0 = arith.constant 0 : i32
    return %arg0, %c0_i32, %arg2 : i32, i32, i32
  }
  func.func @transform_2(%arg0: i32, %arg1: i32, %arg2: i32) -> (i32, i32, i32) {
    %c0_i32 = arith.constant 0 : i32
    %c0_i32_0 = arith.constant 0 : i32
    return %arg0, %arg1, %c0_i32 : i32, i32, i32
  }
}

</mosaic_0001>

<llo_original>
// kernel: tpu_custom_call.1
$region0: #{tpu_custom_call.1}
  #allocation0 [shape = 'u32[]', space=smem, size = 0x4, offset = 0x4, fixed_abs, tag = 'smem constant byte address 0x4 - core index']
  #allocation1 [shape = 'u32[144,128]{1,0:T(1,128)}', space=vmem, size = 0x12000, scoped, tag = 'internal scratch']
  #allocation2 [shape = 'f32[8,1]{1,0:T(8,128)}', space=vmem, size = 0x1000, scoped, tag = 'scratch operand']
  #allocation3 [shape = 'f32[8,1]{1,0:T(8,128)}', space=vmem, size = 0x1000, scoped, tag = 'scratch operand']
  #allocation4 [shape = 'f32[32,8]{1,0:T(8,128)}', space=vmem, size = 0x4000, scoped, tag = 'scratch operand']
  %s0 = inlined_call_operand.hbm [shape: f32[2,32,256], index: 0, kind: input, shape index: {}]
  %s1 = inlined_call_operand.hbm [shape: f32[2,8,256], index: 1, kind: input, shape index: {}]
  %s2 = inlined_call_operand.vmem [shape: f32[2,32,8], index: 2, kind: output, shape index: {}]
  %s3 = sld [smem:[#allocation0]]
  $region57: #{tpu_custom_call.1} parent=0
    _
  %s5 = ssub.s32 1, %s3
  %s6 = scalar_select 0, %s5, %s3
  $region1: #{tpu_custom_call.1} parent=0
    #allocation5 [shape = 'u8[65536]{0}', space=vmem, size = 0x10000, scoped, tag = 'input window, operand 0']
    #allocation6 [shape = 's32[2]{0}', space=sflag, size = 0x8, scoped, tag = 'scoped memory for tpu_custom_call.1']
    #allocation7 [shape = 'u8[16384]{0}', space=vmem, size = 0x4000, scoped, tag = 'input window, operand 1']
    #allocation8 [shape = 's32[2]{0}', space=sflag, size = 0x8, scoped, tag = 'scoped memory for tpu_custom_call.1']
    %7 = vsyncpa [#allocation6], 0
    %s8 = scalar_lea.sflag [#allocation6], 1
    %9 = vsyncpa %s8, 0
    %10 = vsyncpa [#allocation8], 0
    %s11 = scalar_lea.sflag [#allocation8], 1
    %12 = vsyncpa %s11, 0
    loop: start=0, step=1, limit=4
    $region2: #{tpu_custom_call.1} parent=1 // loop_pre_header
      _
    $region3: #{tpu_custom_call.1} parent=1 // loop_header
      %s14 = sphi 0, %s18
      %p15 = scmp.ge.s32.totalorder %s14, 4
      %s21 = sphi 0, %s40
      %s22 = sphi 0, %s36
      %s23 = sphi 0, %s32
      %s24 = sphi 0, %s21
      %s25 = sphi 0, %s22
      %s26 = sphi 0, %s23
      %s27 = sphi 0, %s24
      %s28 = sphi 0, %s25
      %s29 = sphi 0, %s26
      %s47 = sphi 0, %s49
      %s50 = sphi 0, %s47
      %s51 = sphi 0, %s50
      %s67 = sphi 0, %s51
      %s75 = sphi 0, %s77
      %s78 = sphi 0, %s75
      %s79 = sphi 0, %s78
      %s95 = sphi 0, %s79
      %s103 = sphi 0, %s105
      %s106 = sphi 0, %s103
      %s107 = sphi 0, %s106
      %s123 = sphi 0, %s107
    $region4: #{tpu_custom_call.1} parent=1 // loop_header_branch
      %17 = sbr.rel (%p15) target = $region8
    $region5: #{tpu_custom_call.1} parent=1 // loop_body
      %s19 = ssub.s32 %s14, 1
      %s20 = ssub.s32 %s14, 2
      %s30 = sadd.s32 1, %s23
      %p31 = scmp.ge.s32.totalorder %s30, 1
      %s32 = scalar_select %p31, 0, %s30
      %s33 = sadd.s32 1, %s22
      %s34 = scalar_select %p31, %s33, %s22
      %p35 = scmp.ge.s32.totalorder %s34, 1
      %s36 = scalar_select %p35, 0, %s34
      %s37 = sadd.s32 1, %s21
      %s38 = scalar_select %p35, %s37, %s21
      %p39 = scmp.ge.s32.totalorder %s38, 2
      %s40 = scalar_select %p39, 0, %s38
      %s41 = ssub.s32 %s21, %s40
      %s42 = ssub.s32 %s22, %s36
      %s43 = sor.u32 %s41, %s42
      %s44 = ssub.s32 %s23, %s32
      %s45 = sor.u32 %s43, %s44
      %p46 = scmp.eq.s32.totalorder %s45, 0
      %s48 = sadd.s32 %s47, 1
      %s49 = scalar_select %p46, %s47, %s48
      %p52 = pneg %p46
      %p53 = scmp.eq.s32.totalorder %s14, 1
      %p54 = por %p52, %p53
      %p55 = scmp.ne.s32.totalorder %s47, %s50
      %p56 = scmp.eq.s32.totalorder %s14, 0
      %p57 = por %p55, %p56
      %p58 = scmp.ne.s32.totalorder %s47, %s50
      %p59 = scmp.eq.s32.totalorder %s19, 1
      %p60 = por %p58, %p59
      %p61 = scmp.ne.s32.totalorder %s50, %s51
      %p62 = scmp.eq.s32.totalorder %s19, 0
      %p63 = por %p61, %p62
      %p64 = scmp.ne.s32.totalorder %s50, %s51
      %p65 = scmp.eq.s32.totalorder %s20, 1
      %p66 = por %p64, %p65
      %p68 = scmp.ne.s32.totalorder %s51, %s67
      %p69 = scmp.eq.s32.totalorder %s20, 0
      %p70 = por %p68, %p69
      %s71 = ssub.s32 %s21, %s40
      %s72 = ssub.s32 %s23, %s32
      %s73 = sor.u32 %s71, %s72
      %p74 = scmp.eq.s32.totalorder %s73, 0
      %s76 = sadd.s32 %s75, 1
      %s77 = scalar_select %p74, %s75, %s76
      %p80 = pneg %p74
      %p81 = scmp.eq.s32.totalorder %s14, 1
      %p82 = por %p80, %p81
      %p83 = scmp.ne.s32.totalorder %s75, %s78
      %p84 = scmp.eq.s32.totalorder %s14, 0
      %p85 = por %p83, %p84
      %p86 = scmp.ne.s32.totalorder %s75, %s78
      %p87 = scmp.eq.s32.totalorder %s19, 1
      %p88 = por %p86, %p87
      %p89 = scmp.ne.s32.totalorder %s78, %s79
      %p90 = scmp.eq.s32.totalorder %s19, 0
      %p91 = por %p89, %p90
      %p92 = scmp.ne.s32.totalorder %s78, %s79
      %p93 = scmp.eq.s32.totalorder %s20, 1
      %p94 = por %p92, %p93
      %p96 = scmp.ne.s32.totalorder %s79, %s95
      %p97 = scmp.eq.s32.totalorder %s20, 0
      %p98 = por %p96, %p97
      %s99 = ssub.s32 %s21, %s40
      %s100 = ssub.s32 %s22, %s36
      %s101 = sor.u32 %s99, %s100
      %p102 = scmp.eq.s32.totalorder %s101, 0
      %s104 = sadd.s32 %s103, 1
      %s105 = scalar_select %p102, %s103, %s104
      %p108 = pneg %p102
      %p109 = scmp.eq.s32.totalorder %s14, 1
      %p110 = por %p108, %p109
      %p111 = scmp.ne.s32.totalorder %s103, %s106
      %p112 = scmp.eq.s32.totalorder %s14, 0
      %p113 = por %p111, %p112
      %p114 = scmp.ne.s32.totalorder %s103, %s106
      %p115 = scmp.eq.s32.totalorder %s19, 1
      %p116 = por %p114, %p115
      %p117 = scmp.ne.s32.totalorder %s106, %s107
      %p118 = scmp.eq.s32.totalorder %s19, 0
      %p119 = por %p117, %p118
      %p120 = scmp.ne.s32.totalorder %s106, %s107
      %p121 = scmp.eq.s32.totalorder %s20, 1
      %p122 = por %p120, %p121
      %p124 = scmp.ne.s32.totalorder %s107, %s123
      %p125 = scmp.eq.s32.totalorder %s20, 0
      %p126 = por %p124, %p125
      %p127 = scmp.le.s32.totalorder 1, %s14
      %p128 = scmp.lt.s32.totalorder %s14, 3
      %p129 = pnand %p127, %p128
      %p130 = pneg %p129
      // Predicated region
      $region9: #{tpu_custom_call.1} parent=5 // pred_check
        _
      $region10: #{tpu_custom_call.1} parent=5 // pred_check_branch
        %132 = sbr.rel (%p129) target = $region12
      $region11: #{tpu_custom_call.1} parent=5 // pred_region
        %s133 = ssub.s32 %s14, 1
      $region12: #{tpu_custom_call.1} parent=5 // pred_fallthru
        _
      %p134 = scmp.lt.s32.totalorder %s14, 2
      // Predicated region
      $region13: #{tpu_custom_call.1} parent=5 // pred_check
        %p135 = pneg %p134
      $region14: #{tpu_custom_call.1} parent=5 // pred_check_branch
        %137 = sbr.rel (%p135) target = $region16
      $region15: #{tpu_custom_call.1} parent=5 // pred_region
        // Predicated region
        $region17: #{tpu_custom_call.1} parent=15 // pred_check
          %p138 = pneg %p57
        $region18: #{tpu_custom_call.1} parent=15 // pred_check_branch
          %140 = sbr.rel (%p138) target = $region20
        $region19: #{tpu_custom_call.1} parent=15 // pred_region
          %s141 = sand.u32 %s47, 1
          %s142 = scalar_lea.sflag [#allocation6], %s141
          %s143 = sand.u32 %s47, 1
          %s144 = smul.addr %s143, 64
          %s145 = scalar_lea.vmem [#allocation5], %s144
          %s146 = smul.u32 4, %s22
          %s147 = smul.u32 2, %s23
          %s149 = ssub.s32 1024, 1024
          %150 = vsyncadd %s142, %s149
          %s151 = smul.addr %s146, 2
          %s152 = sadd.s32 %s147, %s151
          %s153 = smul.addr %s21, 8
          %s154 = sadd.s32 %s152, %s153
          %s155 = smul.addr %s154, 128
          %s156 = scalar_lea.hbm %s0, %s155
          %s157 = sshll.u32 %s145, 4
          %s158 = int_to_ptr.vmem [resolvable:$true] %s157
          %163 = dma.hbm_to_vmem [thread:$0]  %s156, 1024, %s158, %s142, 256, 256, 16
        $region20: #{tpu_custom_call.1} parent=15 // pred_fallthru
          _
        // Predicated region
        $region21: #{tpu_custom_call.1} parent=15 // pred_check
          %p164 = pneg %p85
        $region22: #{tpu_custom_call.1} parent=15 // pred_check_branch
          %166 = sbr.rel (%p164) target = $region24
        $region23: #{tpu_custom_call.1} parent=15 // pred_region
          %s167 = sand.u32 %s75, 1
          %s168 = scalar_lea.sflag [#allocation8], %s167
          %s169 = sand.u32 %s75, 1
          %s170 = smul.addr %s169, 16
          %s171 = scalar_lea.vmem [#allocation7], %s170
          %s172 = smul.u32 2, %s23
          %s174 = ssub.s32 256, 256
          %175 = vsyncadd %s168, %s174
          %s176 = smul.addr %s21, 2
          %s177 = sadd.s32 %s172, %s176
          %s178 = smul.addr %s177, 128
          %s179 = scalar_lea.hbm %s1, %s178
          %s181 = sshll.u32 %s171, 4
          %s182 = int_to_ptr.vmem [resolvable:$true] %s181
          %184 = dma.hbm_to_vmem [thread:$0]  %s179, 256, %s182, %s168
        $region24: #{tpu_custom_call.1} parent=15 // pred_fallthru
          _
      $region16: #{tpu_custom_call.1} parent=5 // pred_fallthru
        _
      %p185 = scmp.le.s32.totalorder 1, %s14
      %p186 = scmp.lt.s32.totalorder %s14, 3
      %p187 = pnand %p185, %p186
      %p188 = pneg %p187
      // Predicated region
      $region25: #{tpu_custom_call.1} parent=5 // pred_check
        _
      $region26: #{tpu_custom_call.1} parent=5 // pred_check_branch
        %190 = sbr.rel (%p187) target = $region28
      $region27: #{tpu_custom_call.1} parent=5 // pred_region
        %s191 = ssub.s32 %s14, 1
        %s192 = sand.u32 %s50, 1
        %s193 = scalar_lea.sflag [#allocation6], %s192
        %s194 = sand.u32 %s50, 1
        %s195 = smul.addr %s194, 64
        %s196 = scalar_lea.vmem [#allocation5], %s195
        // Predicated region
        $region29: #{tpu_custom_call.1} parent=27 // pred_check
          %p197 = pneg %p63
        $region30: #{tpu_custom_call.1} parent=27 // pred_check_branch
          %199 = sbr.rel (%p197) target = $region32
        $region31: #{tpu_custom_call.1} parent=27 // pred_region
          %200 = dma.done %s193, 1024
        $region32: #{tpu_custom_call.1} parent=27 // pred_fallthru
          _
        %s201 = sand.u32 %s78, 1
        %s202 = scalar_lea.sflag [#allocation8], %s201
        %s203 = sand.u32 %s78, 1
        %s204 = smul.addr %s203, 16
        %s205 = scalar_lea.vmem [#allocation7], %s204
        // Predicated region
        $region33: #{tpu_custom_call.1} parent=27 // pred_check
          %p206 = pneg %p91
        $region34: #{tpu_custom_call.1} parent=27 // pred_check_branch
          %208 = sbr.rel (%p206) target = $region36
        $region35: #{tpu_custom_call.1} parent=27 // pred_region
          %209 = dma.done %s202, 256
        $region36: #{tpu_custom_call.1} parent=27 // pred_fallthru
          _
        %s210 = sand.u32 %s50, 1
        %s211 = scalar_lea.sflag [#allocation6], %s210
        %s212 = sand.u32 %s50, 1
        %s213 = smul.addr %s212, 64
        %s214 = scalar_lea.vmem [#allocation5], %s213
        %p215 = pneg %p63
        %p216 = pneg %p60
        %s217 = sand.u32 %s78, 1
        %s218 = scalar_lea.sflag [#allocation8], %s217
        %s219 = sand.u32 %s78, 1
        %s220 = smul.addr %s219, 16
        %s221 = scalar_lea.vmem [#allocation7], %s220
        %p222 = pneg %p91
        %p223 = pneg %p88
        %p224 = pneg %p119
        %p225 = pneg %p116
        %s226 = smul.u32 4, %s25
        %p227 = scmp.lt.s32.totalorder %s24, 1
        %s228 = scalar_select %p227, %s24, 1
        %p229 = scmp.lt.s32.totalorder %s226, 3
        %s230 = scalar_select %p229, %s226, 3
        %s231 = smul.addr %s228, 4
        %s232 = sadd.s32 %s230, %s231
        %s233 = smul.addr %s232, 8
        %s234 = scalar_lea.vmem %s2, %s233
        %s235 = smul.u32 4, %s25
        %s236 = smul.u32 2, %s26
        %s237 = smul.u32 2, %s26
        %s238 = smul.u32 4, %s25
        %p239 = scmp.lt.s32.totalorder %s24, 1
        %s240 = scalar_select %p239, %s24, 1
        %p241 = scmp.lt.s32.totalorder %s238, 3
        %s242 = scalar_select %p241, %s238, 3
        %s243 = smul.addr %s240, 4
        %s244 = sadd.s32 %s242, %s243
        %s245 = smul.addr %s244, 8
        %s246 = scalar_lea.vmem %s2, %s245
        %s247 = smul.u32 4, %s25
        %p248 = scmp.eq.s32.totalorder %s26, 0
        // Predicated region
        $region37: #{tpu_custom_call.1} parent=27 // pred_check
          %p249 = pneg %p248
        $region38: #{tpu_custom_call.1} parent=27 // pred_check_branch
          %251 = sbr.rel (%p249) target = $region40
        $region39: #{tpu_custom_call.1} parent=27 // pred_region
          %vm252 = vcmask 7168
          %253 = vst.msk [vmem:[#allocation2] sm:$0xff] %vm252, -inf
          %254 = vst.msk [vmem:[#allocation3] sm:$0xff] %vm252, 0.0
          %vm255 = vcmask 64512
          %256 = vst.msk [vmem:[#allocation4] sm:$0xff] %vm255, 0.0
          %257 = vst.msk [vmem:[#allocation4 + $0x8] sm:$0xff] %vm255, 0.0
          %258 = vst.msk [vmem:[#allocation4 + $0x10] sm:$0xff] %vm255, 0.0
          %259 = vst.msk [vmem:[#allocation4 + $0x18] sm:$0xff] %vm255, 0.0
        $region40: #{tpu_custom_call.1} parent=27 // pred_fallthru
          _
        %v260 = vld [vmem:[%s205] sm:$0xff]
        %v261 = vld [vmem:[%s205 + $0x8] sm:$0xff]
        %v262 = vld [vmem:[%s196] sm:$0xff]
        %v263 = vld [vmem:[%s196 + $0x8] sm:$0xff]
        %v264 = vld [vmem:[%s196 + $0x10] sm:$0xff]
        %v265 = vld [vmem:[%s196 + $0x18] sm:$0xff]
        %v266 = vld [vmem:[%s196 + $0x20] sm:$0xff]
        %v267 = vld [vmem:[%s196 + $0x28] sm:$0xff]
        %v268 = vld [vmem:[%s196 + $0x30] sm:$0xff]
        %v269 = vld [vmem:[%s196 + $0x38] sm:$0xff]
        %v270 = vld [vmem:[#allocation2] sm:$0xff]
        %v271 = vmax.f32 %v260, %v261
        %272 = vmax.xlane.f32.xlu0 %v271
        %v273 = vpop.xlane.xlu0 %272
        %v274 = vmax.f32 %v270, %v273
        %v275 = vsub.f32 %v270, %v274
        %v276 = vmul.f32 %v275, 1.442695
        %v277 = vpow.pop %v276
        %279 = vset.pattern.permute.xlu0 0
        %280 = vperm.xlu0 %279, %v274
        %v281 = vpop.permute.xlu0 %280
        %v283 = vsub.f32 %v260, %v281
        %v284 = vsub.f32 %v261, %v281
        %v285 = vmul.f32 %v283, 1.442695
        %v286 = vpow.pop %v285
        %v287 = vmul.f32 %v284, 1.442695
        %v288 = vpow.pop %v287
        %v289 = vld [vmem:[#allocation3] sm:$0xff]
        %v290 = vmul.f32 %v277, %v289
        %v291 = vadd.f32 %v286, %v288
        %292 = vadd.xlane.f32.xlu0 %v291
        %v293 = vpop.xlane.xlu0 %292
        %v294 = vadd.f32 %v290, %v293
        %vm295 = vcmask 7168
        %296 = vst.msk [vmem:[#allocation3] sm:$0xff] %vm295, %v294
        %297 = vxpose.xlu0.b32.start [1/16] %v277, 128
        %298 = vxpose.xlu0.b32.cont [2/16] 0.0, 128
        %299 = vxpose.xlu0.b32.cont [3/16] 0.0, 128
        %300 = vxpose.xlu0.b32.cont [4/16] 0.0, 128
        %301 = vxpose.xlu0.b32.cont [5/16] 0.0, 128
        %302 = vxpose.xlu0.b32.cont [6/16] 0.0, 128
        %303 = vxpose.xlu0.b32.cont [7/16] 0.0, 128
        %304 = vxpose.xlu0.b32.cont [8/16] 0.0, 128
        %305 = vxpose.xlu0.b32.cont [9/16] 0.0, 128
        %306 = vxpose.xlu0.b32.cont [10/16] 0.0, 128
        %307 = vxpose.xlu0.b32.cont [11/16] 0.0, 128
        %308 = vxpose.xlu0.b32.cont [12/16] 0.0, 128
        %309 = vxpose.xlu0.b32.cont [13/16] 0.0, 128
        %310 = vxpose.xlu0.b32.cont [14/16] 0.0, 128
        %311 = vxpose.xlu0.b32.cont [15/16] 0.0, 128
        %312 = vxpose.xlu0.b32.end [16/16] 0.0, 128
        %v313 = vpop.trf.xlu0
        %v314 = vpop.trf.xlu0
        %v315 = vpop.trf.xlu0
        %v316 = vpop.trf.xlu0
        %v317 = vpop.trf.xlu0
        %v318 = vpop.trf.xlu0
        %v319 = vpop.trf.xlu0
        %v320 = vpop.trf.xlu0
        %v321 = vpop.trf.xlu0
        %v322 = vpop.trf.xlu0
        %v323 = vpop.trf.xlu0
        %v324 = vpop.trf.xlu0
        %v325 = vpop.trf.xlu0
        %v326 = vpop.trf.xlu0
        %v327 = vpop.trf.xlu0
        %v328 = vpop.trf.xlu0
        %v329 = vld [vmem:[#allocation4] sm:$0xff]
        %v330 = vld [vmem:[#allocation4 + $0x8] sm:$0xff]
        %v331 = vld [vmem:[#allocation4 + $0x10] sm:$0xff]
        %v332 = vld [vmem:[#allocation4 + $0x18] sm:$0xff]
        %v333 = vlaneseq
        %v334 = vshrl.u32 %v333, 7
        %v335 = vsub.s32 0, %v334
        %v336 = vrot.slane %v313, %v335
        %v337 = vmul.f32 %v336, %v329
        %v338 = vmul.f32 %v336, %v330
        %v339 = vmul.f32 %v336, %v331
        %v340 = vmul.f32 %v336, %v332
        %341 = vmatprep.subr.mxu0 0.0
        %342 = vmatpush1.xpose.msra.mxu0 0.0
        %343 = vmatprep.subr.mxu0 0.0
        %344 = vmatpush1.xpose.msra.mxu0 0.0
        %345 = vmatprep.subr.mxu0 0.0
        %346 = vmatpush1.xpose.msra.mxu0 0.0
        %347 = vmatprep.subr.mxu0 0.0
        %348 = vmatpush1.xpose.msra.mxu0 0.0
        %349 = vmatprep.subr.mxu0 0.0
        %350 = vmatpush1.xpose.msra.mxu0 0.0
        %351 = vmatprep.subr.mxu0 0.0
        %352 = vmatpush1.xpose.msra.mxu0 0.0
        %353 = vmatprep.subr.mxu0 0.0
        %354 = vmatpush1.xpose.msra.mxu0 0.0
        %355 = vmatprep.subr.mxu0 0.0
        %356 = vmatpush1.xpose.msra.mxu0 0.0
        %357 = vmatprep.subr.mxu0 0.0
        %358 = vmatpush1.xpose.msra.mxu0 0.0
        %359 = vmatprep.subr.mxu0 0.0
        %360 = vmatpush1.xpose.msra.mxu0 0.0
        %361 = vmatprep.subr.mxu0 0.0
        %362 = vmatpush1.xpose.msra.mxu0 0.0
        %363 = vmatprep.subr.mxu0 0.0
        %364 = vmatpush1.xpose.msra.mxu0 0.0
        %365 = vmatprep.subr.mxu0 0.0
        %366 = vmatpush1.xpose.msra.mxu0 0.0
        %367 = vmatprep.subr.mxu0 0.0
        %368 = vmatpush1.xpose.msra.mxu0 0.0
        %369 = vmatprep.subr.mxu0 0.0
        %370 = vmatpush1.xpose.msra.mxu0 0.0
        %371 = vmatprep.subr.mxu0 %v288
        %372 = vmatpush1.xpose.msra.mxu0 %v286
        %373 = vmatprep.subr.mxu0 0.0
        %374 = vmatpush2.xpose.msra.mxu0 0.0
        %375 = vmatprep.subr.mxu0 0.0
        %376 = vmatpush2.xpose.msra.mxu0 0.0
        %377 = vmatprep.subr.mxu0 0.0
        %378 = vmatpush2.xpose.msra.mxu0 0.0
        %379 = vmatprep.subr.mxu0 0.0
        %380 = vmatpush2.xpose.msra.mxu0 0.0
        %381 = vmatprep.subr.mxu0 0.0
        %382 = vmatpush2.xpose.msra.mxu0 0.0
        %383 = vmatprep.subr.mxu0 0.0
        %384 = vmatpush2.xpose.msra.mxu0 0.0
        %385 = vmatprep.subr.mxu0 0.0
        %386 = vmatpush2.xpose.msra.mxu0 0.0
        %387 = vmatprep.subr.mxu0 0.0
        %388 = vmatpush2.xpose.msra.mxu0 0.0
        %389 = vmatprep.subr.mxu0 0.0
        %390 = vmatpush2.xpose.msra.mxu0 0.0
        %391 = vmatprep.subr.mxu0 0.0
        %392 = vmatpush2.xpose.msra.mxu0 0.0
        %393 = vmatprep.subr.mxu0 0.0
        %394 = vmatpush2.xpose.msra.mxu0 0.0
        %395 = vmatprep.subr.mxu0 0.0
        %396 = vmatpush2.xpose.msra.mxu0 0.0
        %397 = vmatprep.subr.mxu0 0.0
        %398 = vmatpush2.xpose.msra.mxu0 0.0
        %399 = vmatprep.subr.mxu0 0.0
        %400 = vmatpush2.xpose.msra.mxu0 0.0
        %401 = vmatprep.subr.mxu0 0.0
        %402 = vmatpush2.xpose.msra.mxu0 0.0
        %403 = vmatprep.subr.mxu0 0.0
        %404 = vmatpush2.xpose.msra.mxu0 0.0
        %405 = vmatprep.mubr.f32.mxu0 %v263
        %406 = vmatmul.mubr.f32.gmra.mxu0 %v262
        %v407 = vpop.f32.mrf.mxu0
        %v408 = vadd.f32 0.0, %v407
        %v409 = vpop.f32.mrf.mxu0
        %410 = vmatprep.mubr.f32.mxu0 %v265
        %411 = vmatmul.mubr.f32.gmra.mxu0 %v264
        %v412 = vpop.f32.mrf.mxu0
        %v413 = vadd.f32 0.0, %v412
        %v414 = vpop.f32.mrf.mxu0
        %415 = vmatprep.mubr.f32.mxu0 %v267
        %416 = vmatmul.mubr.f32.gmra.mxu0 %v266
        %v417 = vpop.f32.mrf.mxu0
        %v418 = vadd.f32 0.0, %v417
        %v419 = vpop.f32.mrf.mxu0
        %420 = vmatprep.mubr.f32.mxu0 %v269
        %421 = vmatmul.mubr.f32.gmra.mxu0 %v268
        %v422 = vpop.f32.mrf.mxu0
        %v423 = vadd.f32 0.0, %v422
        %v424 = vpop.f32.mrf.mxu0
        %425 = vdwg.mxu0
        %v426 = vadd.f32 %v337, %v408
        %v427 = vadd.f32 %v338, %v413
        %v428 = vadd.f32 %v339, %v418
        %v429 = vadd.f32 %v340, %v423
        %vm430 = vcmask 64512
        %431 = vst.msk [vmem:[#allocation4] sm:$0xff] %vm430, %v426
        %432 = vst.msk [vmem:[#allocation4 + $0x8] sm:$0xff] %vm430, %v427
        %433 = vst.msk [vmem:[#allocation4 + $0x10] sm:$0xff] %vm430, %v428
        %434 = vst.msk [vmem:[#allocation4 + $0x18] sm:$0xff] %vm430, %v429
        %435 = vst.msk [vmem:[#allocation2] sm:$0xff] %vm295, %v274
        // Predicated region
        $region41: #{tpu_custom_call.1} parent=27 // pred_check
          %p436 = pneg %p248
        $region42: #{tpu_custom_call.1} parent=27 // pred_check_branch
          %438 = sbr.rel (%p436) target = $region44
        $region43: #{tpu_custom_call.1} parent=27 // pred_region
          %v439 = vld [vmem:[#allocation3] sm:$0xff]
          %v440 = vrcp.pop %v439
          %v441 = vld [vmem:[#allocation4] sm:$0xff]
          %v442 = vld [vmem:[#allocation4 + $0x8] sm:$0xff]
          %v443 = vld [vmem:[#allocation4 + $0x10] sm:$0xff]
          %v444 = vld [vmem:[#allocation4 + $0x18] sm:$0xff]
          %445 = vxpose.xlu0.b32.start [1/16] %v440, 128
          %446 = vxpose.xlu0.b32.cont [2/16] 0.0, 128
          %447 = vxpose.xlu0.b32.cont [3/16] 0.0, 128
          %448 = vxpose.xlu0.b32.cont [4/16] 0.0, 128
          %449 = vxpose.xlu0.b32.cont [5/16] 0.0, 128
          %450 = vxpose.xlu0.b32.cont [6/16] 0.0, 128
          %451 = vxpose.xlu0.b32.cont [7/16] 0.0, 128
          %452 = vxpose.xlu0.b32.cont [8/16] 0.0, 128
          %453 = vxpose.xlu0.b32.cont [9/16] 0.0, 128
          %454 = vxpose.xlu0.b32.cont [10/16] 0.0, 128
          %455 = vxpose.xlu0.b32.cont [11/16] 0.0, 128
          %456 = vxpose.xlu0.b32.cont [12/16] 0.0, 128
          %457 = vxpose.xlu0.b32.cont [13/16] 0.0, 128
          %458 = vxpose.xlu0.b32.cont [14/16] 0.0, 128
          %459 = vxpose.xlu0.b32.cont [15/16] 0.0, 128
          %460 = vxpose.xlu0.b32.end [16/16] 0.0, 128
          %v461 = vpop.trf.xlu0
          %v462 = vpop.trf.xlu0
          %v463 = vpop.trf.xlu0
          %v464 = vpop.trf.xlu0
          %v465 = vpop.trf.xlu0
          %v466 = vpop.trf.xlu0
          %v467 = vpop.trf.xlu0
          %v468 = vpop.trf.xlu0
          %v469 = vpop.trf.xlu0
          %v470 = vpop.trf.xlu0
          %v471 = vpop.trf.xlu0
          %v472 = vpop.trf.xlu0
          %v473 = vpop.trf.xlu0
          %v474 = vpop.trf.xlu0
          %v475 = vpop.trf.xlu0
          %v476 = vpop.trf.xlu0
          %v477 = vlaneseq
          %v478 = vshrl.u32 %v477, 7
          %v479 = vsub.s32 0, %v478
          %v480 = vrot.slane %v461, %v479
          %v481 = vmul.f32 %v441, %v480
          %v482 = vmul.f32 %v442, %v480
          %v483 = vmul.f32 %v443, %v480
          %v484 = vmul.f32 %v444, %v480
          %485 = vst.msk [vmem:[%s246] sm:$0xff] %vm430, %v481
          %486 = vst.msk [vmem:[%s246 + $0x8] sm:$0xff] %vm430, %v482
          %487 = vst.msk [vmem:[%s246 + $0x10] sm:$0xff] %vm430, %v483
          %488 = vst.msk [vmem:[%s246 + $0x18] sm:$0xff] %vm430, %v484
        $region44: #{tpu_custom_call.1} parent=27 // pred_fallthru
          _
        %s489 = smul.u32 4, %s25
        %p490 = scmp.lt.s32.totalorder %s24, 1
        %s491 = scalar_select %p490, %s24, 1
        %p492 = scmp.lt.s32.totalorder %s489, 3
        %s493 = scalar_select %p492, %s489, 3
        %s494 = smul.addr %s491, 4
        %s495 = sadd.s32 %s493, %s494
        %s496 = smul.addr %s495, 8
        %s497 = scalar_lea.vmem %s2, %s496
        // Predicated region
        $region45: #{tpu_custom_call.1} parent=27 // pred_check
          %p498 = pneg %p116
        $region46: #{tpu_custom_call.1} parent=27 // pred_check_branch
          %500 = sbr.rel (%p498) target = $region48
        $region47: #{tpu_custom_call.1} parent=27 // pred_region
          %s501 = smul.u32 4, %s25
        $region48: #{tpu_custom_call.1} parent=27 // pred_fallthru
          _
      $region28: #{tpu_custom_call.1} parent=5 // pred_fallthru
        _
      %p502 = scmp.le.s32.totalorder 2, %s14
      // Predicated region
      $region49: #{tpu_custom_call.1} parent=5 // pred_check
        %p503 = pneg %p502
      $region50: #{tpu_custom_call.1} parent=5 // pred_check_branch
        %505 = sbr.rel (%p503) target = $region52
      $region51: #{tpu_custom_call.1} parent=5 // pred_region
        %s506 = ssub.s32 %s14, 2
        // Predicated region
        $region53: #{tpu_custom_call.1} parent=51 // pred_check
          %p507 = pneg %p122
        $region54: #{tpu_custom_call.1} parent=51 // pred_check_branch
          %509 = sbr.rel (%p507) target = $region56
        $region55: #{tpu_custom_call.1} parent=51 // pred_region
          %s510 = smul.u32 4, %s28
          %p511 = scmp.lt.s32.totalorder %s27, 1
          %s512 = scalar_select %p511, %s27, 1
          %p513 = scmp.lt.s32.totalorder %s510, 3
          %s514 = scalar_select %p513, %s510, 3
          %s515 = smul.addr %s512, 4
          %s516 = sadd.s32 %s514, %s515
          %s517 = smul.addr %s516, 8
          %s518 = scalar_lea.vmem %s2, %s517
        $region56: #{tpu_custom_call.1} parent=51 // pred_fallthru
          _
      $region52: #{tpu_custom_call.1} parent=5 // pred_fallthru
        _
    $region6: #{tpu_custom_call.1} parent=1 // loop_footer
      %s18 = sadd.s32 1, %s14
    $region7: #{tpu_custom_call.1} parent=1 // loop_footer_branch
      %13 = sbr.rel target = $region3
    $region8: #{tpu_custom_call.1} parent=1 // loop_exit
      _
    %519 = vsyncpa [#allocation6], 1
    %s520 = scalar_lea.sflag [#allocation6], 1
    %521 = vsyncpa %s520, 1
    %522 = vsyncpa [#allocation8], 1
    %s523 = scalar_lea.sflag [#allocation8], 1
    %524 = vsyncpa %s523, 1

</llo_original>
